<compile_context>
chip_gen: v6e
topology: v6e:2x2x1
jax: 0.10.0
libtpu: 0.0.40
codegen_flags: <defaults>
</compile_context>

<pallas_src>
import functools

import jax
import jax.numpy as jnp
from jax.experimental import pallas as pl
from jax.experimental.pallas import tpu as pltpu


def _round_up(n, m):
    return ((n + m - 1) // m) * m


def _vmem_cap_bytes():
    """Generation-aware usable VMEM ceiling for vmem_limit_bytes."""
    try:
        cap = pltpu.get_tpu_info().vmem_capacity_bytes
    except Exception:
        cap = 128 << 20
    if cap <= (64 << 20):                       # v7x: 64 MiB/TC physical
        return min(cap - (8 << 20), 56 << 20)   # leave headroom for scratch
    return min(cap, 100 << 20)                  # v5e / v6e: 128 MiB physical


_VMEM_CAP = _vmem_cap_bytes()


def _mlp_logsoftmax_kernel(num_classes,
                           x_ref, w0_ref, b0_ref, w1_ref, b1_ref,
                           w2_ref, b2_ref, out_ref):
    # x arrives as f32; cast to bf16 in-kernel for the MXU (f32 accumulation).
    x = x_ref[...].astype(w0_ref.dtype)
    # Hidden block 0: Linear -> ReLU (Dropout == identity at inference).
    h = jnp.dot(x, w0_ref[...], preferred_element_type=jnp.float32)
    h = jnp.maximum(h + b0_ref[...], 0.0)
    # Hidden block 1: Linear -> ReLU.
    h = jnp.dot(h.astype(w1_ref.dtype), w1_ref[...],
                preferred_element_type=jnp.float32)
    h = jnp.maximum(h + b1_ref[...], 0.0)
    # Final classifier: Linear (hidden_layers[-1]).
    logits = jnp.dot(h.astype(w2_ref.dtype), w2_ref[...],
                     preferred_element_type=jnp.float32) + b2_ref[...]
    # Mask the padded class lanes so they do not perturb max / sum of the
    # log-softmax (output is lane-dense C_pad wide; real classes in [:C]).
    col = jax.lax.broadcasted_iota(jnp.int32, logits.shape, 1)
    logits = jnp.where(col < num_classes, logits, -1e30)
    # log_softmax over dim=1 (last axis), all in f32.
    m = jnp.max(logits, axis=-1, keepdims=True)
    shifted = logits - m
    lse = jnp.log(jnp.sum(jnp.exp(shifted), axis=-1, keepdims=True))
    out_ref[...] = shifted - lse


def prepare_params(params):
    """One-time pad (to multiples of 128) + cast of the parameters.

    Weights -> bf16 MXU operands, biases -> f32.  Returns (prepared_params,
    num_classes).  Do this once, outside the per-call forward.
    """
    D_in, H = params["w0"].shape
    C = params["w_out"].shape[1]
    D_p, H_p, C_p = _round_up(D_in, 128), _round_up(H, 128), _round_up(C, 128)

    def pad2(a, rows, cols, dtype):
        return jnp.pad(a, ((0, rows - a.shape[0]),
                           (0, cols - a.shape[1]))).astype(dtype)

    prepared = {
        "w0": pad2(params["w0"], D_p, H_p, jnp.bfloat16),
        "b0": pad2(params["b0"], 1, H_p, jnp.float32),
        "w1": pad2(params["w1"], H_p, H_p, jnp.bfloat16),
        "b1": pad2(params["b1"], 1, H_p, jnp.float32),
        "w_out": pad2(params["w_out"], H_p, C_p, jnp.bfloat16),
        "b_out": pad2(params["b_out"], 1, C_p, jnp.float32),
    }
    return prepared, C


@functools.partial(jax.jit, static_argnames=("num_classes", "block_batch"))
def domain_discriminator_forward(x, prepared, *, num_classes, block_batch=512):
    """x: (B, input_size) f32.  prepared: output of prepare_params()."""
    B, D_in = x.shape
    D_p, H_p = prepared["w0"].shape
    C_p = prepared["w_out"].shape[1]
    C = num_classes

    # ---- batch tile selection ------------------------------------------------
    # Larger tiles amortize the ~0.35 us/step overhead; double the tile for
    # small/medium hidden sizes.
    base = block_batch * (2 if H_p <= 1024 else 1)
    B8 = _round_up(B, 8)
    tm = min(_round_up(base, 8), B8)
    # Megacore (v7x): make sure the batch grid has >= 2 steps when possible so
    # both TensorCores get work.
    if B8 >= 16 and (B8 // tm) < 2:
        tm = _round_up(B8 // 2, 8)

    # VMEM footprint: double-buffered x/out tiles, single-buffered resident
    # weights (Buffered(1)) and biases.
    def footprint(tm_):
        return (2 * tm_ * D_p * 4                      # f32 x tiles (x2 bufs)
                + 2 * tm_ * C_p * 4                    # f32 out tiles (x2 bufs)
                + (D_p * H_p + H_p * H_p + H_p * C_p) * 2   # bf16 weights (x1)
                + (2 * H_p + C_p) * 4)                 # f32 biases (x1)

    while tm > 8 and footprint(tm) + (4 << 20) > _VMEM_CAP:
        tm = _round_up(tm // 2, 8)

    B_p = _round_up(B, tm)

    # ---- input: pad only when needed, keep f32 (kernel casts to bf16) -------
    if (B_p, D_p) != (B, D_in):
        x_in = jnp.pad(x, ((0, B_p - B), (0, D_p - D_in)))
    else:
        x_in = x
    x_in = x_in.astype(jnp.float32)

    grid = (B_p // tm,)
    vmem = pltpu.MemorySpace.VMEM

    # x / out tiles stream across the batch grid (double-buffered pipeline);
    # weights / biases use a constant block index + single buffer so exactly
    # one VMEM-resident copy exists for the whole call.
    x_spec = pl.BlockSpec((tm, D_p), lambda i: (i, 0), memory_space=vmem)
    out_spec = pl.BlockSpec((tm, C_p), lambda i: (i, 0), memory_space=vmem)

    def const_spec(shape):
        return pl.BlockSpec(shape, lambda i: (0, 0), memory_space=vmem,
                            pipeline_mode=pl.Buffered(1))

    vmem_limit = int(min(max(footprint(tm) + (4 << 20), 16 << 20), _VMEM_CAP))

    out_padded = pl.pallas_call(
        functools.partial(_mlp_logsoftmax_kernel, C),
        out_shape=jax.ShapeDtypeStruct((B_p, C_p), jnp.float32),
        grid=grid,
        in_specs=[
            x_spec,
            const_spec((D_p, H_p)), const_spec((1, H_p)),
            const_spec((H_p, H_p)), const_spec((1, H_p)),
            const_spec((H_p, C_p)), const_spec((1, C_p)),
        ],
        out_specs=out_spec,
        compiler_params=pltpu.CompilerParams(
            dimension_semantics=("parallel",),
            vmem_limit_bytes=vmem_limit,
        ),
    )(x_in, prepared["w0"], prepared["b0"], prepared["w1"], prepared["b1"],
      prepared["w_out"], prepared["b_out"])

    # Drop batch / class padding (keep the (B, C) contract of the module).
    return out_padded[:B, :C]


def init_params(key, input_size, hidden_size, num_classes):
    """Deterministic synthetic parameters.

    Weights stored as (in_features, out_features) == transpose of PyTorch's
    nn.Linear weight; biases are (1, out_features).  hidden_layers[2] of the
    PyTorch module is built but never used in forward(), so it is omitted.
    """
    ks = jax.random.split(key, 6)
    scale = 0.02
    return {
        "w0": scale * jax.random.normal(ks[0], (input_size, hidden_size), jnp.float32),
        "b0": scale * jax.random.normal(ks[1], (1, hidden_size), jnp.float32),
        "w1": scale * jax.random.normal(ks[2], (hidden_size, hidden_size), jnp.float32),
        "b1": scale * jax.random.normal(ks[3], (1, hidden_size), jnp.float32),
        "w_out": scale * jax.random.normal(ks[4], (hidden_size, num_classes), jnp.float32),
        "b_out": scale * jax.random.normal(ks[5], (1, num_classes), jnp.float32),
    }


def reference_forward(x, params):
    """Pure-JAX f32 reference mirroring the PyTorch forward (eval mode)."""
    h = jnp.maximum(x @ params["w0"] + params["b0"], 0.0)
    h = jnp.maximum(h @ params["w1"] + params["b1"], 0.0)
    logits = h @ params["w_out"] + params["b_out"]
    return jax.nn.log_softmax(logits, axis=1)


if __name__ == "__main__":
    # Small shapes consistent with the module (input_size == hidden_size,
    # 6 classes), scaled down.  batch=24 exercises batch padding and a
    # multi-step (megacore-splittable) grid.
    batch, input_size, hidden_size, num_classes = 24, 64, 64, 6

    key = jax.random.PRNGKey(0)
    k_x, k_p = jax.random.split(key)
    x = jax.random.normal(k_x, (batch, input_size), jnp.float32)
    params = init_params(k_p, input_size, hidden_size, num_classes)

    # One-time parameter pad/cast (not paid per forward call).
    prepared, n_cls = prepare_params(params)

    out = domain_discriminator_forward(x, prepared, num_classes=n_cls)
    out = jax.block_until_ready(out)

    ref = reference_forward(x, params)
    assert out.shape == (batch, num_classes)
    # Kernel uses bf16 MXU operands with f32 accumulation -> loose tolerance
    # against the pure-f32 reference.
    assert jnp.allclose(out, ref, atol=2e-2, rtol=2e-2), "mismatch vs reference"
    # log_softmax rows should sum (in prob space) to ~1.
    assert jnp.allclose(jnp.sum(jnp.exp(out), axis=1), 1.0, atol=1e-4)

    print("KERNEL_OK")
</pallas_src>

<mosaic_0001>
module attributes {stable_mosaic.version = 11 : i64} {
  func.func @_mlp_logsoftmax_kernel(%arg0: i32, %arg1: memref<16x128xf32, #tpu.memory_space<vmem>>, %arg2: memref<128x128xbf16, #tpu.memory_space<vmem>>, %arg3: memref<1x128xf32, #tpu.memory_space<vmem>>, %arg4: memref<128x128xbf16, #tpu.memory_space<vmem>>, %arg5: memref<1x128xf32, #tpu.memory_space<vmem>>, %arg6: memref<128x128xbf16, #tpu.memory_space<vmem>>, %arg7: memref<1x128xf32, #tpu.memory_space<vmem>>, %arg8: memref<16x128xf32, #tpu.memory_space<vmem>>) attributes {dimension_semantics = [#tpu.dimension_semantics<parallel>], iteration_bounds = array<i64: 2>, scalar_prefetch = 0 : i64, scratch_operands = 0 : i64, tpu.core_type = #tpu.core_type<tc>, window_params = [{transform_indices = @transform_0, window_bounds = array<i64: 16, 128>}, {pipeline_mode = #tpu.pipeline_mode<synchronous>, transform_indices = @transform_1, window_bounds = array<i64: 128, 128>}, {pipeline_mode = #tpu.pipeline_mode<synchronous>, transform_indices = @transform_2, window_bounds = array<i64: 1, 128>}, {pipeline_mode = #tpu.pipeline_mode<synchronous>, transform_indices = @transform_3, window_bounds = array<i64: 128, 128>}, {pipeline_mode = #tpu.pipeline_mode<synchronous>, transform_indices = @transform_4, window_bounds = array<i64: 1, 128>}, {pipeline_mode = #tpu.pipeline_mode<synchronous>, transform_indices = @transform_5, window_bounds = array<i64: 128, 128>}, {pipeline_mode = #tpu.pipeline_mode<synchronous>, transform_indices = @transform_6, window_bounds = array<i64: 1, 128>}, {transform_indices = @transform_7, window_bounds = array<i64: 16, 128>}]} {
    %c0 = arith.constant 0 : index
    %c0_0 = arith.constant 0 : index
    %0 = vector.load %arg1[%c0, %c0_0] : memref<16x128xf32, #tpu.memory_space<vmem>>, vector<16x128xf32>
    %1 = arith.truncf %0 : vector<16x128xf32> to vector<16x128xbf16>
    %c0_1 = arith.constant 0 : index
    %c0_2 = arith.constant 0 : index
    %2 = vector.load %arg2[%c0_1, %c0_2] : memref<128x128xbf16, #tpu.memory_space<vmem>>, vector<128x128xbf16>
    %cst = arith.constant dense<0.000000e+00> : vector<16x128xf32>
    %3 = tpu.matmul %1, %2, %cst {dimension_numbers = #tpu.dot_dimension_numbers<[1], [0], [0], [1], [0, 0, 1, 1], [], []>} : vector<16x128xbf16>, vector<128x128xbf16>, vector<16x128xf32> -> vector<16x128xf32>
    %c0_3 = arith.constant 0 : index
    %c0_4 = arith.constant 0 : index
    %4 = vector.load %arg3[%c0_3, %c0_4] : memref<1x128xf32, #tpu.memory_space<vmem>>, vector<1x128xf32>
    %5 = vector.broadcast %4 : vector<1x128xf32> to vector<16x128xf32>
    %6 = arith.addf %3, %5 : vector<16x128xf32>
    %cst_5 = arith.constant 0.000000e+00 : f32
    %7 = vector.broadcast %cst_5 : f32 to vector<16x128xf32>
    %8 = arith.maximumf %6, %7 : vector<16x128xf32>
    %9 = arith.truncf %8 : vector<16x128xf32> to vector<16x128xbf16>
    %c0_6 = arith.constant 0 : index
    %c0_7 = arith.constant 0 : index
    %10 = vector.load %arg4[%c0_6, %c0_7] : memref<128x128xbf16, #tpu.memory_space<vmem>>, vector<128x128xbf16>
    %cst_8 = arith.constant dense<0.000000e+00> : vector<16x128xf32>
    %11 = tpu.matmul %9, %10, %cst_8 {dimension_numbers = #tpu.dot_dimension_numbers<[1], [0], [0], [1], [0, 0, 1, 1], [], []>} : vector<16x128xbf16>, vector<128x128xbf16>, vector<16x128xf32> -> vector<16x128xf32>
    %c0_9 = arith.constant 0 : index
    %c0_10 = arith.constant 0 : index
    %12 = vector.load %arg5[%c0_9, %c0_10] : memref<1x128xf32, #tpu.memory_space<vmem>>, vector<1x128xf32>
    %13 = vector.broadcast %12 : vector<1x128xf32> to vector<16x128xf32>
    %14 = arith.addf %11, %13 : vector<16x128xf32>
    %cst_11 = arith.constant 0.000000e+00 : f32
    %15 = vector.broadcast %cst_11 : f32 to vector<16x128xf32>
    %16 = arith.maximumf %14, %15 : vector<16x128xf32>
    %17 = arith.truncf %16 : vector<16x128xf32> to vector<16x128xbf16>
    %c0_12 = arith.constant 0 : index
    %c0_13 = arith.constant 0 : index
    %18 = vector.load %arg6[%c0_12, %c0_13] : memref<128x128xbf16, #tpu.memory_space<vmem>>, vector<128x128xbf16>
    %cst_14 = arith.constant dense<0.000000e+00> : vector<16x128xf32>
    %19 = tpu.matmul %17, %18, %cst_14 {dimension_numbers = #tpu.dot_dimension_numbers<[1], [0], [0], [1], [0, 0, 1, 1], [], []>} : vector<16x128xbf16>, vector<128x128xbf16>, vector<16x128xf32> -> vector<16x128xf32>
    %c0_15 = arith.constant 0 : index
    %c0_16 = arith.constant 0 : index
    %20 = vector.load %arg7[%c0_15, %c0_16] : memref<1x128xf32, #tpu.memory_space<vmem>>, vector<1x128xf32>
    %21 = vector.broadcast %20 : vector<1x128xf32> to vector<16x128xf32>
    %22 = arith.addf %19, %21 : vector<16x128xf32>
    %23 = tpu.iota {dimensions = array<i32: 1>} : vector<16x128xi32>
    %c6_i32 = arith.constant 6 : i32
    %24 = vector.broadcast %c6_i32 : i32 to vector<16x128xi32>
    %25 = arith.cmpi slt, %23, %24 : vector<16x128xi32>
    %cst_17 = arith.constant -1.000000e+30 : f32
    %26 = vector.broadcast %cst_17 : f32 to vector<16x128xf32>
    %27 = arith.select %25, %22, %26 : vector<16x128xi1>, vector<16x128xf32>
    %cst_18 = arith.constant dense<0xFF800000> : vector<16xf32>
    %28 = vector.multi_reduction <maximumf>, %27, %cst_18 [1] : vector<16x128xf32> to vector<16xf32>
    %29 = vector.shape_cast %28 : vector<16xf32> to vector<16x1xf32>
    %30 = vector.broadcast %29 : vector<16x1xf32> to vector<16x128xf32>
    %31 = arith.subf %27, %30 : vector<16x128xf32>
    %32 = math.exp %31 : vector<16x128xf32>
    %cst_19 = arith.constant dense<0.000000e+00> : vector<16xf32>
    %33 = vector.multi_reduction <add>, %32, %cst_19 [1] : vector<16x128xf32> to vector<16xf32>
    %34 = vector.shape_cast %33 : vector<16xf32> to vector<16x1xf32>
    %35 = math.log %34 : vector<16x1xf32>
    %36 = vector.broadcast %35 : vector<16x1xf32> to vector<16x128xf32>
    %37 = arith.subf %31, %36 : vector<16x128xf32>
    %c0_20 = arith.constant 0 : index
    %c0_21 = arith.constant 0 : index
    %38 = vector.load %arg8[%c0_20, %c0_21] : memref<16x128xf32, #tpu.memory_space<vmem>>, vector<16x128xf32>
    tpu.vector_store %arg8[%c0_20, %c0_21], %37 {strides = array<i32>} : memref<16x128xf32, #tpu.memory_space<vmem>>, vector<16x128xf32>,
    return
  }
  func.func @transform_0(%arg0: i32) -> (i32, i32) {
    %c0_i32 = arith.constant 0 : i32
    %c0_i32_0 = arith.constant 0 : i32
    return %arg0, %c0_i32 : i32, i32
  }
  func.func @transform_1(%arg0: i32) -> (i32, i32) {
    %c0_i32 = arith.constant 0 : i32
    %c0_i32_0 = arith.constant 0 : i32
    %c0_i32_1 = arith.constant 0 : i32
    return %c0_i32, %c0_i32_0 : i32, i32
  }
  func.func @transform_2(%arg0: i32) -> (i32, i32) {
    %c0_i32 = arith.constant 0 : i32
    %c0_i32_0 = arith.constant 0 : i32
    %c0_i32_1 = arith.constant 0 : i32
    return %c0_i32, %c0_i32_0 : i32, i32
  }
  func.func @transform_3(%arg0: i32) -> (i32, i32) {
    %c0_i32 = arith.constant 0 : i32
    %c0_i32_0 = arith.constant 0 : i32
    %c0_i32_1 = arith.constant 0 : i32
    return %c0_i32, %c0_i32_0 : i32, i32
  }
  func.func @transform_4(%arg0: i32) -> (i32, i32) {
    %c0_i32 = arith.constant 0 : i32
    %c0_i32_0 = arith.constant 0 : i32
    %c0_i32_1 = arith.constant 0 : i32
    return %c0_i32, %c0_i32_0 : i32, i32
  }
  func.func @transform_5(%arg0: i32) -> (i32, i32) {
    %c0_i32 = arith.constant 0 : i32
    %c0_i32_0 = arith.constant 0 : i32
    %c0_i32_1 = arith.constant 0 : i32
    return %c0_i32, %c0_i32_0 : i32, i32
  }
  func.func @transform_6(%arg0: i32) -> (i32, i32) {
    %c0_i32 = arith.constant 0 : i32
    %c0_i32_0 = arith.constant 0 : i32
    %c0_i32_1 = arith.constant 0 : i32
    return %c0_i32, %c0_i32_0 : i32, i32
  }
  func.func @transform_7(%arg0: i32) -> (i32, i32) {
    %c0_i32 = arith.constant 0 : i32
    %c0_i32_0 = arith.constant 0 : i32
    return %arg0, %c0_i32 : i32, i32
  }
}

</mosaic_0001>

<llo_original>
// kernel: domain_discriminator_forward.1
$region0: #{domain_discriminator_forward.1}
  #allocation0 [shape = 'u32[]', space=smem, size = 0x4, offset = 0x4, fixed_abs, tag = 'smem constant byte address 0x4 - core index']
  #allocation1 [shape = 'u32[144,128]{1,0:T(1,128)}', space=vmem, size = 0x12000, scoped, tag = 'internal scratch']
  %s0 = inlined_call_operand.vmem [shape: f32[32,128], index: 0, kind: input, shape index: {}]
  %s1 = inlined_call_operand.vmem [shape: bf16[128,128], index: 1, kind: input, shape index: {}]
  %s2 = inlined_call_operand.hbm [shape: f32[1,128], index: 2, kind: input, shape index: {}]
  %s3 = inlined_call_operand.hbm [shape: bf16[128,128], index: 3, kind: input, shape index: {}]
  %s4 = inlined_call_operand.hbm [shape: f32[1,128], index: 4, kind: input, shape index: {}]
  %s5 = inlined_call_operand.hbm [shape: bf16[128,128], index: 5, kind: input, shape index: {}]
  %s6 = inlined_call_operand.hbm [shape: f32[1,128], index: 6, kind: input, shape index: {}]
  %s7 = inlined_call_operand.vmem [shape: f32[32,128], index: 7, kind: output, shape index: {}]
  %s8 = sld [smem:[#allocation0]]
  $region81: #{domain_discriminator_forward.1} parent=0
    _
  %s10 = ssub.s32 1, %s8
  %s11 = scalar_select 0, %s10, %s8
  $region1: #{domain_discriminator_forward.1} parent=0
    #allocation2 [shape = 'u8[512]{0}', space=vmem, size = 0x400, scoped, tag = 'input window, operand 2, single buffered']
    #allocation3 [shape = 's32[2]{0}', space=sflag, size = 0x8, scoped, tag = 'scoped memory for domain_discriminator_forward.1']
    #allocation4 [shape = 'u8[32768]{0}', space=vmem, size = 0x8000, scoped, tag = 'input window, operand 3, single buffered']
    #allocation5 [shape = 's32[1]{0}', space=sflag, size = 0x4, scoped, tag = 'scoped memory for domain_discriminator_forward.1']
    #allocation6 [shape = 'u8[512]{0}', space=vmem, size = 0x400, scoped, tag = 'input window, operand 4, single buffered']
    #allocation7 [shape = 'u8[32768]{0}', space=vmem, size = 0x8000, scoped, tag = 'input window, operand 5, single buffered']
    #allocation8 [shape = 's32[1]{0}', space=sflag, size = 0x4, scoped, tag = 'scoped memory for domain_discriminator_forward.1']
    #allocation9 [shape = 'u8[512]{0}', space=vmem, size = 0x400, scoped, tag = 'input window, operand 6, single buffered']
    %12 = vsyncpa [#allocation3], 0
    %13 = vsyncpa [#allocation5], 0
    %14 = vsyncpa [#allocation8], 0
    loop: start=0, step=1, limit=4
    $region2: #{domain_discriminator_forward.1} parent=1 // loop_pre_header
      _
    $region3: #{domain_discriminator_forward.1} parent=1 // loop_header
      %s16 = sphi 0, %s20
      %p17 = scmp.ge.s32.totalorder %s16, 4
      %s26 = sphi 0, %s28
      %s29 = sphi 0, %s26
      %s30 = sphi 0, %s29
      %s46 = sphi 0, %s30
      %s50 = sphi 0, %s50
      %s52 = sphi 0, %s50
      %s53 = sphi 0, %s52
      %s67 = sphi 0, %s53
      %s71 = sphi 0, %s71
      %s73 = sphi 0, %s71
      %s74 = sphi 0, %s73
      %s88 = sphi 0, %s74
      %s92 = sphi 0, %s92
      %s94 = sphi 0, %s92
      %s95 = sphi 0, %s94
      %s109 = sphi 0, %s95
      %s113 = sphi 0, %s113
      %s115 = sphi 0, %s113
      %s116 = sphi 0, %s115
      %s130 = sphi 0, %s116
      %s134 = sphi 0, %s134
      %s136 = sphi 0, %s134
      %s137 = sphi 0, %s136
      %s151 = sphi 0, %s137
      %s155 = sphi 0, %s155
      %s157 = sphi 0, %s155
      %s158 = sphi 0, %s157
      %s172 = sphi 0, %s158
      %s178 = sphi 0, %s180
      %s181 = sphi 0, %s178
      %s182 = sphi 0, %s181
      %s198 = sphi 0, %s182
    $region4: #{domain_discriminator_forward.1} parent=1 // loop_header_branch
      %19 = sbr.rel (%p17) target = $region8
    $region5: #{domain_discriminator_forward.1} parent=1 // loop_body
      %s21 = ssub.s32 %s16, 1
      %s22 = ssub.s32 %s16, 2
      %s23 = sadd.s32 %s16, 1
      %s24 = ssub.s32 %s16, %s23
      %p25 = scmp.eq.s32.totalorder %s24, 0
      %s27 = sadd.s32 %s26, 1
      %s28 = scalar_select %p25, %s26, %s27
      %p31 = pneg %p25
      %p32 = scmp.eq.s32.totalorder %s16, 1
      %p33 = por %p31, %p32
      %p34 = scmp.ne.s32.totalorder %s26, %s29
      %p35 = scmp.eq.s32.totalorder %s16, 0
      %p36 = por %p34, %p35
      %p37 = scmp.ne.s32.totalorder %s26, %s29
      %p38 = scmp.eq.s32.totalorder %s21, 1
      %p39 = por %p37, %p38
      %p40 = scmp.ne.s32.totalorder %s29, %s30
      %p41 = scmp.eq.s32.totalorder %s21, 0
      %p42 = por %p40, %p41
      %p43 = scmp.ne.s32.totalorder %s29, %s30
      %p44 = scmp.eq.s32.totalorder %s22, 1
      %p45 = por %p43, %p44
      %p47 = scmp.ne.s32.totalorder %s30, %s46
      %p48 = scmp.eq.s32.totalorder %s22, 0
      %p49 = por %p47, %p48
      %s51 = sadd.s32 %s50, 1
      %p54 = scmp.eq.s32.totalorder %s16, 1
      %p55 = scmp.ne.s32.totalorder %s50, %s52
      %p56 = scmp.eq.s32.totalorder %s16, 0
      %p57 = por %p55, %p56
      %p58 = scmp.ne.s32.totalorder %s50, %s52
      %p59 = scmp.eq.s32.totalorder %s21, 1
      %p60 = por %p58, %p59
      %p61 = scmp.ne.s32.totalorder %s52, %s53
      %p62 = scmp.eq.s32.totalorder %s21, 0
      %p63 = por %p61, %p62
      %p64 = scmp.ne.s32.totalorder %s52, %s53
      %p65 = scmp.eq.s32.totalorder %s22, 1
      %p66 = por %p64, %p65
      %p68 = scmp.ne.s32.totalorder %s53, %s67
      %p69 = scmp.eq.s32.totalorder %s22, 0
      %p70 = por %p68, %p69
      %s72 = sadd.s32 %s71, 1
      %p75 = scmp.eq.s32.totalorder %s16, 1
      %p76 = scmp.ne.s32.totalorder %s71, %s73
      %p77 = scmp.eq.s32.totalorder %s16, 0
      %p78 = por %p76, %p77
      %p79 = scmp.ne.s32.totalorder %s71, %s73
      %p80 = scmp.eq.s32.totalorder %s21, 1
      %p81 = por %p79, %p80
      %p82 = scmp.ne.s32.totalorder %s73, %s74
      %p83 = scmp.eq.s32.totalorder %s21, 0
      %p84 = por %p82, %p83
      %p85 = scmp.ne.s32.totalorder %s73, %s74
      %p86 = scmp.eq.s32.totalorder %s22, 1
      %p87 = por %p85, %p86
      %p89 = scmp.ne.s32.totalorder %s74, %s88
      %p90 = scmp.eq.s32.totalorder %s22, 0
      %p91 = por %p89, %p90
      %s93 = sadd.s32 %s92, 1
      %p96 = scmp.eq.s32.totalorder %s16, 1
      %p97 = scmp.ne.s32.totalorder %s92, %s94
      %p98 = scmp.eq.s32.totalorder %s16, 0
      %p99 = por %p97, %p98
      %p100 = scmp.ne.s32.totalorder %s92, %s94
      %p101 = scmp.eq.s32.totalorder %s21, 1
      %p102 = por %p100, %p101
      %p103 = scmp.ne.s32.totalorder %s94, %s95
      %p104 = scmp.eq.s32.totalorder %s21, 0
      %p105 = por %p103, %p104
      %p106 = scmp.ne.s32.totalorder %s94, %s95
      %p107 = scmp.eq.s32.totalorder %s22, 1
      %p108 = por %p106, %p107
      %p110 = scmp.ne.s32.totalorder %s95, %s109
      %p111 = scmp.eq.s32.totalorder %s22, 0
      %p112 = por %p110, %p111
      %s114 = sadd.s32 %s113, 1
      %p117 = scmp.eq.s32.totalorder %s16, 1
      %p118 = scmp.ne.s32.totalorder %s113, %s115
      %p119 = scmp.eq.s32.totalorder %s16, 0
      %p120 = por %p118, %p119
      %p121 = scmp.ne.s32.totalorder %s113, %s115
      %p122 = scmp.eq.s32.totalorder %s21, 1
      %p123 = por %p121, %p122
      %p124 = scmp.ne.s32.totalorder %s115, %s116
      %p125 = scmp.eq.s32.totalorder %s21, 0
      %p126 = por %p124, %p125
      %p127 = scmp.ne.s32.totalorder %s115, %s116
      %p128 = scmp.eq.s32.totalorder %s22, 1
      %p129 = por %p127, %p128
      %p131 = scmp.ne.s32.totalorder %s116, %s130
      %p132 = scmp.eq.s32.totalorder %s22, 0
      %p133 = por %p131, %p132
      %s135 = sadd.s32 %s134, 1
      %p138 = scmp.eq.s32.totalorder %s16, 1
      %p139 = scmp.ne.s32.totalorder %s134, %s136
      %p140 = scmp.eq.s32.totalorder %s16, 0
      %p141 = por %p139, %p140
      %p142 = scmp.ne.s32.totalorder %s134, %s136
      %p143 = scmp.eq.s32.totalorder %s21, 1
      %p144 = por %p142, %p143
      %p145 = scmp.ne.s32.totalorder %s136, %s137
      %p146 = scmp.eq.s32.totalorder %s21, 0
      %p147 = por %p145, %p146
      %p148 = scmp.ne.s32.totalorder %s136, %s137
      %p149 = scmp.eq.s32.totalorder %s22, 1
      %p150 = por %p148, %p149
      %p152 = scmp.ne.s32.totalorder %s137, %s151
      %p153 = scmp.eq.s32.totalorder %s22, 0
      %p154 = por %p152, %p153
      %s156 = sadd.s32 %s155, 1
      %p159 = scmp.eq.s32.totalorder %s16, 1
      %p160 = scmp.ne.s32.totalorder %s155, %s157
      %p161 = scmp.eq.s32.totalorder %s16, 0
      %p162 = por %p160, %p161
      %p163 = scmp.ne.s32.totalorder %s155, %s157
      %p164 = scmp.eq.s32.totalorder %s21, 1
      %p165 = por %p163, %p164
      %p166 = scmp.ne.s32.totalorder %s157, %s158
      %p167 = scmp.eq.s32.totalorder %s21, 0
      %p168 = por %p166, %p167
      %p169 = scmp.ne.s32.totalorder %s157, %s158
      %p170 = scmp.eq.s32.totalorder %s22, 1
      %p171 = por %p169, %p170
      %p173 = scmp.ne.s32.totalorder %s158, %s172
      %p174 = scmp.eq.s32.totalorder %s22, 0
      %p175 = por %p173, %p174
      %s176 = ssub.s32 %s16, %s23
      %p177 = scmp.eq.s32.totalorder %s176, 0
      %s179 = sadd.s32 %s178, 1
      %s180 = scalar_select %p177, %s178, %s179
      %p183 = pneg %p177
      %p184 = scmp.eq.s32.totalorder %s16, 1
      %p185 = por %p183, %p184
      %p186 = scmp.ne.s32.totalorder %s178, %s181
      %p187 = scmp.eq.s32.totalorder %s16, 0
      %p188 = por %p186, %p187
      %p189 = scmp.ne.s32.totalorder %s178, %s181
      %p190 = scmp.eq.s32.totalorder %s21, 1
      %p191 = por %p189, %p190
      %p192 = scmp.ne.s32.totalorder %s181, %s182
      %p193 = scmp.eq.s32.totalorder %s21, 0
      %p194 = por %p192, %p193
      %p195 = scmp.ne.s32.totalorder %s181, %s182
      %p196 = scmp.eq.s32.totalorder %s22, 1
      %p197 = por %p195, %p196
      %p199 = scmp.ne.s32.totalorder %s182, %s198
      %p200 = scmp.eq.s32.totalorder %s22, 0
      %p201 = por %p199, %p200
      %p202 = scmp.le.s32.totalorder 1, %s16
      %p203 = scmp.lt.s32.totalorder %s16, 3
      %p204 = pnand %p202, %p203
      %p205 = pneg %p204
      // Predicated region
      $region9: #{domain_discriminator_forward.1} parent=5 // pred_check
        _
      $region10: #{domain_discriminator_forward.1} parent=5 // pred_check_branch
        %207 = sbr.rel (%p204) target = $region12
      $region11: #{domain_discriminator_forward.1} parent=5 // pred_region
        %s208 = ssub.s32 %s16, 1
        // Predicated region
        $region13: #{domain_discriminator_forward.1} parent=11 // pred_check
          %p209 = pneg %p63
        $region14: #{domain_discriminator_forward.1} parent=11 // pred_check_branch
          %211 = sbr.rel (%p209) target = $region16
        $region15: #{domain_discriminator_forward.1} parent=11 // pred_region
          _
        $region16: #{domain_discriminator_forward.1} parent=11 // pred_fallthru
          _
        // Predicated region
        $region17: #{domain_discriminator_forward.1} parent=11 // pred_check
          %p212 = pneg %p84
        $region18: #{domain_discriminator_forward.1} parent=11 // pred_check_branch
          %214 = sbr.rel (%p212) target = $region20
        $region19: #{domain_discriminator_forward.1} parent=11 // pred_region
          %s216 = ssub.s32 16, 16
          %217 = vsyncadd [#allocation3], %s216
          %s219 = sshll.u32 [#allocation2], 4
          %s220 = int_to_ptr.vmem [resolvable:$true] %s219
          %222 = dma.hbm_to_vmem [thread:$0]  %s2, 16, %s220, [#allocation3]
        $region20: #{domain_discriminator_forward.1} parent=11 // pred_fallthru
          _
        // Predicated region
        $region21: #{domain_discriminator_forward.1} parent=11 // pred_check
          %p223 = pneg %p105
        $region22: #{domain_discriminator_forward.1} parent=11 // pred_check_branch
          %225 = sbr.rel (%p223) target = $region24
        $region23: #{domain_discriminator_forward.1} parent=11 // pred_region
          %s227 = ssub.s32 1024, 1024
          %228 = vsyncadd [#allocation5], %s227
          %s229 = sshll.u32 [#allocation4], 4
          %s230 = int_to_ptr.vmem [resolvable:$true] %s229
          %235 = dma.hbm_to_vmem [thread:$0]  %s3, 1024, %s230, [#allocation5], 64, 64, 4
        $region24: #{domain_discriminator_forward.1} parent=11 // pred_fallthru
          _
        // Predicated region
        $region25: #{domain_discriminator_forward.1} parent=11 // pred_check
          %p236 = pneg %p126
        $region26: #{domain_discriminator_forward.1} parent=11 // pred_check_branch
          %238 = sbr.rel (%p236) target = $region28
        $region27: #{domain_discriminator_forward.1} parent=11 // pred_region
          %s240 = ssub.s32 16, 16
          %241 = vsyncadd [#allocation5], %s240
          %s243 = sshll.u32 [#allocation6], 4
          %s244 = int_to_ptr.vmem [resolvable:$true] %s243
          %246 = dma.hbm_to_vmem [thread:$0]  %s4, 16, %s244, [#allocation5]
        $region28: #{domain_discriminator_forward.1} parent=11 // pred_fallthru
          _
        // Predicated region
        $region29: #{domain_discriminator_forward.1} parent=11 // pred_check
          %p247 = pneg %p147
        $region30: #{domain_discriminator_forward.1} parent=11 // pred_check_branch
          %249 = sbr.rel (%p247) target = $region32
        $region31: #{domain_discriminator_forward.1} parent=11 // pred_region
          %s251 = ssub.s32 1024, 1024
          %252 = vsyncadd [#allocation8], %s251
          %s253 = sshll.u32 [#allocation7], 4
          %s254 = int_to_ptr.vmem [resolvable:$true] %s253
          %259 = dma.hbm_to_vmem [thread:$0]  %s5, 1024, %s254, [#allocation8], 64, 64, 4
        $region32: #{domain_discriminator_forward.1} parent=11 // pred_fallthru
          _
        // Predicated region
        $region33: #{domain_discriminator_forward.1} parent=11 // pred_check
          %p260 = pneg %p168
        $region34: #{domain_discriminator_forward.1} parent=11 // pred_check_branch
          %262 = sbr.rel (%p260) target = $region36
        $region35: #{domain_discriminator_forward.1} parent=11 // pred_region
          %s264 = ssub.s32 16, 16
          %265 = vsyncadd [#allocation8], %s264
          %s267 = sshll.u32 [#allocation9], 4
          %s268 = int_to_ptr.vmem [resolvable:$true] %s267
          %270 = dma.hbm_to_vmem [thread:$0]  %s6, 16, %s268, [#allocation8]
        $region36: #{domain_discriminator_forward.1} parent=11 // pred_fallthru
          _
      $region12: #{domain_discriminator_forward.1} parent=5 // pred_fallthru
        _
      %p271 = scmp.lt.s32.totalorder %s16, 2
      // Predicated region
      $region37: #{domain_discriminator_forward.1} parent=5 // pred_check
        %p272 = pneg %p271
      $region38: #{domain_discriminator_forward.1} parent=5 // pred_check_branch
        %274 = sbr.rel (%p272) target = $region40
      $region39: #{domain_discriminator_forward.1} parent=5 // pred_region
        // Predicated region
        $region41: #{domain_discriminator_forward.1} parent=39 // pred_check
          %p275 = pneg %p36
        $region42: #{domain_discriminator_forward.1} parent=39 // pred_check_branch
          %277 = sbr.rel (%p275) target = $region44
        $region43: #{domain_discriminator_forward.1} parent=39 // pred_region
          %s278 = smul.u32 2, %s16
          %p279 = scmp.lt.s32.totalorder %s278, 3
          %s280 = scalar_select %p279, %s278, 3
          %s281 = smul.addr %s280, 8
          %s282 = scalar_lea.vmem %s0, %s281
          %s283 = smul.u32 2, %s16
        $region44: #{domain_discriminator_forward.1} parent=39 // pred_fallthru
          _
      $region40: #{domain_discriminator_forward.1} parent=5 // pred_fallthru
        _
      %p284 = scmp.le.s32.totalorder 1, %s16
      %p285 = scmp.lt.s32.totalorder %s16, 3
      %p286 = pnand %p284, %p285
      %p287 = pneg %p286
      // Predicated region
      $region45: #{domain_discriminator_forward.1} parent=5 // pred_check
        _
      $region46: #{domain_discriminator_forward.1} parent=5 // pred_check_branch
        %289 = sbr.rel (%p286) target = $region48
      $region47: #{domain_discriminator_forward.1} parent=5 // pred_region
        %s290 = ssub.s32 %s16, 1
        // Predicated region
        $region49: #{domain_discriminator_forward.1} parent=47 // pred_check
          %p291 = pneg %p84
        $region50: #{domain_discriminator_forward.1} parent=47 // pred_check_branch
          %293 = sbr.rel (%p291) target = $region52
        $region51: #{domain_discriminator_forward.1} parent=47 // pred_region
          %294 = dma.done [#allocation3], 16
        $region52: #{domain_discriminator_forward.1} parent=47 // pred_fallthru
          _
        // Predicated region
        $region53: #{domain_discriminator_forward.1} parent=47 // pred_check
          %p295 = pneg %p105
        $region54: #{domain_discriminator_forward.1} parent=47 // pred_check_branch
          %297 = sbr.rel (%p295) target = $region56
        $region55: #{domain_discriminator_forward.1} parent=47 // pred_region
          %298 = dma.done [#allocation5], 1024
        $region56: #{domain_discriminator_forward.1} parent=47 // pred_fallthru
          _
        // Predicated region
        $region57: #{domain_discriminator_forward.1} parent=47 // pred_check
          %p299 = pneg %p126
        $region58: #{domain_discriminator_forward.1} parent=47 // pred_check_branch
          %301 = sbr.rel (%p299) target = $region60
        $region59: #{domain_discriminator_forward.1} parent=47 // pred_region
          %302 = dma.done [#allocation5], 16
        $region60: #{domain_discriminator_forward.1} parent=47 // pred_fallthru
          _
        // Predicated region
        $region61: #{domain_discriminator_forward.1} parent=47 // pred_check
          %p303 = pneg %p147
        $region62: #{domain_discriminator_forward.1} parent=47 // pred_check_branch
          %305 = sbr.rel (%p303) target = $region64
        $region63: #{domain_discriminator_forward.1} parent=47 // pred_region
          %306 = dma.done [#allocation8], 1024
        $region64: #{domain_discriminator_forward.1} parent=47 // pred_fallthru
          _
        // Predicated region
        $region65: #{domain_discriminator_forward.1} parent=47 // pred_check
          %p307 = pneg %p168
        $region66: #{domain_discriminator_forward.1} parent=47 // pred_check_branch
          %309 = sbr.rel (%p307) target = $region68
        $region67: #{domain_discriminator_forward.1} parent=47 // pred_region
          %310 = dma.done [#allocation8], 16
        $region68: #{domain_discriminator_forward.1} parent=47 // pred_fallthru
          _
        %s311 = smul.u32 2, %s21
        %p312 = scmp.lt.s32.totalorder %s311, 3
        %s313 = scalar_select %p312, %s311, 3
        %s314 = smul.addr %s313, 8
        %s315 = scalar_lea.vmem %s0, %s314
        %p316 = pneg %p42
        %p317 = pneg %p39
        %p318 = pneg %p63
        %p319 = pneg %p60
        %p320 = pneg %p84
        %p321 = pneg %p81
        %p322 = pneg %p105
        %p323 = pneg %p102
        %p324 = pneg %p126
        %p325 = pneg %p123
        %p326 = pneg %p147
        %p327 = pneg %p144
        %p328 = pneg %p168
        %p329 = pneg %p165
        %p330 = pneg %p194
        %p331 = pneg %p191
        %s332 = smul.u32 2, %s21
        %p333 = scmp.lt.s32.totalorder %s332, 3
        %s334 = scalar_select %p333, %s332, 3
        %s335 = smul.addr %s334, 8
        %s336 = scalar_lea.vmem %s7, %s335
        %s337 = smul.u32 2, %s21
        %p338 = scmp.lt.s32.totalorder %s337, 3
        %s339 = scalar_select %p338, %s337, 3
        %s340 = smul.addr %s339, 8
        %s341 = scalar_lea.vmem %s0, %s340
        %s342 = smul.u32 2, %s21
        %s343 = smul.u32 2, %s21
        %p344 = scmp.lt.s32.totalorder %s343, 3
        %s345 = scalar_select %p344, %s343, 3
        %s346 = smul.addr %s345, 8
        %s347 = scalar_lea.vmem %s7, %s346
        %s348 = smul.u32 2, %s21
        %v350 = vld [vmem:[%s341] sm:$0xff]
        %v351 = vld [vmem:[%s341 + $0x8] sm:$0xff]
        %v352 = vpack.c.bf16 %v351, %v350
        %v353 = vld [vmem:[%s1] sm:$0xf]
        %v354 = vld [vmem:[%s1 + $0x4] sm:$0xf]
        %v355 = vld [vmem:[%s1 + $0x8] sm:$0xf]
        %v356 = vld [vmem:[%s1 + $0xc] sm:$0xf]
        %v357 = vld [vmem:[%s1 + $0x10] sm:$0xf]
        %v358 = vld [vmem:[%s1 + $0x14] sm:$0xf]
        %v359 = vld [vmem:[%s1 + $0x18] sm:$0xf]
        %v360 = vld [vmem:[%s1 + $0x1c] sm:$0xf]
        %v361 = vld [vmem:[%s1 + $0x20] sm:$0xf]
        %v362 = vld [vmem:[%s1 + $0x24] sm:$0xf]
        %v363 = vld [vmem:[%s1 + $0x28] sm:$0xf]
        %v364 = vld [vmem:[%s1 + $0x2c] sm:$0xf]
        %v365 = vld [vmem:[%s1 + $0x30] sm:$0xf]
        %v366 = vld [vmem:[%s1 + $0x34] sm:$0xf]
        %v367 = vld [vmem:[%s1 + $0x38] sm:$0xf]
        %v368 = vld [vmem:[%s1 + $0x3c] sm:$0xf]
        %v369 = vld [vmem:[#allocation2] sm:$0x1]
        %v371 = vlaneseq
        %v372 = vshrl.u32 %v371, 7
        %v373 = vsub.s32 0, %v372
        %v374 = vrot.slane %v369, %v373
        %v392 = vunpack.c.l.b16 %v353
        %v393 = vunpack.c.l.b16 %v354
        %v394 = vunpack.c.l.b16 %v355
        %v395 = vunpack.c.l.b16 %v356
        %v396 = vunpack.c.l.b16 %v357
        %v397 = vunpack.c.l.b16 %v358
        %v398 = vunpack.c.l.b16 %v359
        %v399 = vunpack.c.l.b16 %v360
        %v400 = vunpack.c.l.b16 %v361
        %v401 = vunpack.c.l.b16 %v362
        %v402 = vunpack.c.l.b16 %v363
        %v403 = vunpack.c.l.b16 %v364
        %v404 = vunpack.c.l.b16 %v365
        %v405 = vunpack.c.l.b16 %v366
        %v406 = vunpack.c.l.b16 %v367
        %v407 = vunpack.c.l.b16 %v368
        %v408 = vpack.c.b16 %v393, %v392
        %v409 = vpack.c.b16 %v395, %v394
        %v410 = vpack.c.b16 %v397, %v396
        %v411 = vpack.c.b16 %v399, %v398
        %v412 = vpack.c.b16 %v401, %v400
        %v413 = vpack.c.b16 %v403, %v402
        %v414 = vpack.c.b16 %v405, %v404
        %v415 = vpack.c.b16 %v407, %v406
        %424 = vmatprep.subr.bf16.mxu0 0
        %425 = vmatpush1.bf16.msra.mxu0 %v415
        %426 = vmatprep.subr.bf16.mxu0 0
        %427 = vmatpush1.bf16.msra.mxu0 %v414
        %428 = vmatprep.subr.bf16.mxu0 0
        %429 = vmatpush1.bf16.msra.mxu0 %v413
        %430 = vmatprep.subr.bf16.mxu0 0
        %431 = vmatpush1.bf16.msra.mxu0 %v412
        %432 = vmatprep.subr.bf16.mxu0 0
        %433 = vmatpush1.bf16.msra.mxu0 %v411
        %434 = vmatprep.subr.bf16.mxu0 0
        %435 = vmatpush1.bf16.msra.mxu0 %v410
        %436 = vmatprep.subr.bf16.mxu0 0
        %437 = vmatpush1.bf16.msra.mxu0 %v409
        %438 = vmatprep.subr.bf16.mxu0 0
        %439 = vmatpush1.bf16.msra.mxu0 %v408
        %440 = vmatprep.subr.bf16.mxu0 0
        %441 = vmatpush2.bf16.msra.mxu0 0
        %442 = vmatprep.subr.bf16.mxu0 0
        %443 = vmatpush2.bf16.msra.mxu0 0
        %444 = vmatprep.subr.bf16.mxu0 0
        %445 = vmatpush2.bf16.msra.mxu0 0
        %446 = vmatprep.subr.bf16.mxu0 0
        %447 = vmatpush2.bf16.msra.mxu0 0
        %448 = vmatprep.subr.bf16.mxu0 0
        %449 = vmatpush2.bf16.msra.mxu0 0
        %450 = vmatprep.subr.bf16.mxu0 0
        %451 = vmatpush2.bf16.msra.mxu0 0
        %452 = vmatprep.subr.bf16.mxu0 0
        %453 = vmatpush2.bf16.msra.mxu0 0
        %454 = vmatprep.subr.bf16.mxu0 0
        %455 = vmatpush2.bf16.msra.mxu0 0
        %456 = vmatprep.mubr.bf16.mxu0 0
        %457 = vmatmul.mubr.bf16.gmra.mxu0 %v352
        %v458 = vpop.f32.mrf.mxu0
        %v459 = vadd.f32 %v374, %v458
        %v460 = vpop.f32.mrf.mxu0
        %v461 = vpop.f32.mrf.mxu0
        %v462 = vadd.f32 %v374, %v461
        %v463 = vpop.f32.mrf.mxu0
        %464 = vdwg.mxu0
        %v465 = vmax.f32 %v459, 0.0
        %v466 = vmax.f32 %v462, 0.0
        %v467 = vpack.c.bf16 %v466, %v465
        %v468 = vld [vmem:[#allocation4] sm:$0xf]
        %v469 = vld [vmem:[#allocation4 + $0x4] sm:$0xf]
        %v470 = vld [vmem:[#allocation4 + $0x8] sm:$0xf]
        %v471 = vld [vmem:[#allocation4 + $0xc] sm:$0xf]
        %v472 = vld [vmem:[#allocation4 + $0x10] sm:$0xf]
        %v473 = vld [vmem:[#allocation4 + $0x14] sm:$0xf]
        %v474 = vld [vmem:[#allocation4 + $0x18] sm:$0xf]
        %v475 = vld [vmem:[#allocation4 + $0x1c] sm:$0xf]
        %v476 = vld [vmem:[#allocation4 + $0x20] sm:$0xf]
        %v477 = vld [vmem:[#allocation4 + $0x24] sm:$0xf]
        %v478 = vld [vmem:[#allocation4 + $0x28] sm:$0xf]
        %v479 = vld [vmem:[#allocation4 + $0x2c] sm:$0xf]
        %v480 = vld [vmem:[#allocation4 + $0x30] sm:$0xf]
        %v481 = vld [vmem:[#allocation4 + $0x34] sm:$0xf]
        %v482 = vld [vmem:[#allocation4 + $0x38] sm:$0xf]
        %v483 = vld [vmem:[#allocation4 + $0x3c] sm:$0xf]
        %v484 = vld [vmem:[#allocation6] sm:$0x1]
        %v486 = vlaneseq
        %v487 = vshrl.u32 %v486, 7
        %v488 = vsub.s32 0, %v487
        %v489 = vrot.slane %v484, %v488
        %v507 = vunpack.c.l.b16 %v468
        %v508 = vunpack.c.l.b16 %v469
        %v509 = vunpack.c.l.b16 %v470
        %v510 = vunpack.c.l.b16 %v471
        %v511 = vunpack.c.l.b16 %v472
        %v512 = vunpack.c.l.b16 %v473
        %v513 = vunpack.c.l.b16 %v474
        %v514 = vunpack.c.l.b16 %v475
        %v515 = vunpack.c.l.b16 %v476
        %v516 = vunpack.c.l.b16 %v477
        %v517 = vunpack.c.l.b16 %v478
        %v518 = vunpack.c.l.b16 %v479
        %v519 = vunpack.c.l.b16 %v480
        %v520 = vunpack.c.l.b16 %v481
        %v521 = vunpack.c.l.b16 %v482
        %v522 = vunpack.c.l.b16 %v483
        %v523 = vpack.c.b16 %v508, %v507
        %v524 = vpack.c.b16 %v510, %v509
        %v525 = vpack.c.b16 %v512, %v511
        %v526 = vpack.c.b16 %v514, %v513
        %v527 = vpack.c.b16 %v516, %v515
        %v528 = vpack.c.b16 %v518, %v517
        %v529 = vpack.c.b16 %v520, %v519
        %v530 = vpack.c.b16 %v522, %v521
        %539 = vmatprep.subr.bf16.mxu0 0
        %540 = vmatpush1.bf16.msra.mxu0 %v530
        %541 = vmatprep.subr.bf16.mxu0 0
        %542 = vmatpush1.bf16.msra.mxu0 %v529
        %543 = vmatprep.subr.bf16.mxu0 0
        %544 = vmatpush1.bf16.msra.mxu0 %v528
        %545 = vmatprep.subr.bf16.mxu0 0
        %546 = vmatpush1.bf16.msra.mxu0 %v527
        %547 = vmatprep.subr.bf16.mxu0 0
        %548 = vmatpush1.bf16.msra.mxu0 %v526
        %549 = vmatprep.subr.bf16.mxu0 0
        %550 = vmatpush1.bf16.msra.mxu0 %v525
        %551 = vmatprep.subr.bf16.mxu0 0
        %552 = vmatpush1.bf16.msra.mxu0 %v524
        %553 = vmatprep.subr.bf16.mxu0 0
        %554 = vmatpush1.bf16.msra.mxu0 %v523
        %555 = vmatprep.subr.bf16.mxu0 0
        %556 = vmatpush2.bf16.msra.mxu0 0
        %557 = vmatprep.subr.bf16.mxu0 0
        %558 = vmatpush2.bf16.msra.mxu0 0
        %559 = vmatprep.subr.bf16.mxu0 0
        %560 = vmatpush2.bf16.msra.mxu0 0
        %561 = vmatprep.subr.bf16.mxu0 0
        %562 = vmatpush2.bf16.msra.mxu0 0
        %563 = vmatprep.subr.bf16.mxu0 0
        %564 = vmatpush2.bf16.msra.mxu0 0
        %565 = vmatprep.subr.bf16.mxu0 0
        %566 = vmatpush2.bf16.msra.mxu0 0
        %567 = vmatprep.subr.bf16.mxu0 0
        %568 = vmatpush2.bf16.msra.mxu0 0
        %569 = vmatprep.subr.bf16.mxu0 0
        %570 = vmatpush2.bf16.msra.mxu0 0
        %571 = vmatprep.mubr.bf16.mxu0 0
        %572 = vmatmul.mubr.bf16.gmra.mxu0 %v467
        %v573 = vpop.f32.mrf.mxu0
        %v574 = vadd.f32 %v489, %v573
        %v575 = vpop.f32.mrf.mxu0
        %v576 = vpop.f32.mrf.mxu0
        %v577 = vadd.f32 %v489, %v576
        %v578 = vpop.f32.mrf.mxu0
        %579 = vdwg.mxu0
        %v580 = vmax.f32 %v574, 0.0
        %v581 = vmax.f32 %v577, 0.0
        %v582 = vpack.c.bf16 %v581, %v580
        %v583 = vld [vmem:[#allocation7] sm:$0xf]
        %v584 = vld [vmem:[#allocation7 + $0x4] sm:$0xf]
        %v585 = vld [vmem:[#allocation7 + $0x8] sm:$0xf]
        %v586 = vld [vmem:[#allocation7 + $0xc] sm:$0xf]
        %v587 = vld [vmem:[#allocation7 + $0x10] sm:$0xf]
        %v588 = vld [vmem:[#allocation7 + $0x14] sm:$0xf]
        %v589 = vld [vmem:[#allocation7 + $0x18] sm:$0xf]
        %v590 = vld [vmem:[#allocation7 + $0x1c] sm:$0xf]
        %v591 = vld [vmem:[#allocation7 + $0x20] sm:$0xf]
        %v592 = vld [vmem:[#allocation7 + $0x24] sm:$0xf]
        %v593 = vld [vmem:[#allocation7 + $0x28] sm:$0xf]
        %v594 = vld [vmem:[#allocation7 + $0x2c] sm:$0xf]
        %v595 = vld [vmem:[#allocation7 + $0x30] sm:$0xf]
        %v596 = vld [vmem:[#allocation7 + $0x34] sm:$0xf]
        %v597 = vld [vmem:[#allocation7 + $0x38] sm:$0xf]
        %v598 = vld [vmem:[#allocation7 + $0x3c] sm:$0xf]
        %v599 = vld [vmem:[#allocation9] sm:$0x1]
        %v601 = vlaneseq
        %v602 = vshrl.u32 %v601, 7
        %v603 = vsub.s32 0, %v602
        %v604 = vrot.slane %v599, %v603
        %v622 = vunpack.c.l.b16 %v583
        %v623 = vunpack.c.l.b16 %v584
        %v624 = vunpack.c.l.b16 %v585
        %v625 = vunpack.c.l.b16 %v586
        %v626 = vunpack.c.l.b16 %v587
        %v627 = vunpack.c.l.b16 %v588
        %v628 = vunpack.c.l.b16 %v589
        %v629 = vunpack.c.l.b16 %v590
        %v630 = vunpack.c.l.b16 %v591
        %v631 = vunpack.c.l.b16 %v592
        %v632 = vunpack.c.l.b16 %v593
        %v633 = vunpack.c.l.b16 %v594
        %v634 = vunpack.c.l.b16 %v595
        %v635 = vunpack.c.l.b16 %v596
        %v636 = vunpack.c.l.b16 %v597
        %v637 = vunpack.c.l.b16 %v598
        %v638 = vpack.c.b16 %v623, %v622
        %v639 = vpack.c.b16 %v625, %v624
        %v640 = vpack.c.b16 %v627, %v626
        %v641 = vpack.c.b16 %v629, %v628
        %v642 = vpack.c.b16 %v631, %v630
        %v643 = vpack.c.b16 %v633, %v632
        %v644 = vpack.c.b16 %v635, %v634
        %v645 = vpack.c.b16 %v637, %v636
        %654 = vmatprep.subr.bf16.mxu0 0
        %655 = vmatpush1.bf16.msra.mxu0 %v645
        %656 = vmatprep.subr.bf16.mxu0 0
        %657 = vmatpush1.bf16.msra.mxu0 %v644
        %658 = vmatprep.subr.bf16.mxu0 0
        %659 = vmatpush1.bf16.msra.mxu0 %v643
        %660 = vmatprep.subr.bf16.mxu0 0
        %661 = vmatpush1.bf16.msra.mxu0 %v642
        %662 = vmatprep.subr.bf16.mxu0 0
        %663 = vmatpush1.bf16.msra.mxu0 %v641
        %664 = vmatprep.subr.bf16.mxu0 0
        %665 = vmatpush1.bf16.msra.mxu0 %v640
        %666 = vmatprep.subr.bf16.mxu0 0
        %667 = vmatpush1.bf16.msra.mxu0 %v639
        %668 = vmatprep.subr.bf16.mxu0 0
        %669 = vmatpush1.bf16.msra.mxu0 %v638
        %670 = vmatprep.subr.bf16.mxu0 0
        %671 = vmatpush2.bf16.msra.mxu0 0
        %672 = vmatprep.subr.bf16.mxu0 0
        %673 = vmatpush2.bf16.msra.mxu0 0
        %674 = vmatprep.subr.bf16.mxu0 0
        %675 = vmatpush2.bf16.msra.mxu0 0
        %676 = vmatprep.subr.bf16.mxu0 0
        %677 = vmatpush2.bf16.msra.mxu0 0
        %678 = vmatprep.subr.bf16.mxu0 0
        %679 = vmatpush2.bf16.msra.mxu0 0
        %680 = vmatprep.subr.bf16.mxu0 0
        %681 = vmatpush2.bf16.msra.mxu0 0
        %682 = vmatprep.subr.bf16.mxu0 0
        %683 = vmatpush2.bf16.msra.mxu0 0
        %684 = vmatprep.subr.bf16.mxu0 0
        %685 = vmatpush2.bf16.msra.mxu0 0
        %686 = vmatprep.mubr.bf16.mxu0 0
        %687 = vmatmul.mubr.bf16.gmra.mxu0 %v582
        %v688 = vpop.f32.mrf.mxu0
        %v689 = vadd.f32 %v604, %v688
        %v690 = vpop.f32.mrf.mxu0
        %v691 = vpop.f32.mrf.mxu0
        %v692 = vadd.f32 %v604, %v691
        %v693 = vpop.f32.mrf.mxu0
        %694 = vdwg.mxu0
        %v695 = vlaneseq
        %v696 = vand.u32 %v695, 127
        %vm697 = vcmp.lt.s32.totalorder %v696, 6
        %v698 = vsel %vm697, %v689, -1e+30
        %v699 = vsel %vm697, %v692, -1e+30
        %700 = vmax.xlane.f32.xlu0 %v698
        %v701 = vpop.xlane.xlu0 %700
        %702 = vmax.xlane.f32.xlu0 %v699
        %v703 = vpop.xlane.xlu0 %702
        %v704 = vsub.f32 %v698, %v701
        %v705 = vsub.f32 %v699, %v703
        %v706 = vmul.f32 %v704, 1.442695
        %v707 = vpow.pop %v706
        %v708 = vmul.f32 %v705, 1.442695
        %v709 = vpow.pop %v708
        %710 = vadd.xlane.f32.xlu0 %v707
        %v711 = vpop.xlane.xlu0 %710
        %712 = vadd.xlane.f32.xlu0 %v709
        %v713 = vpop.xlane.xlu0 %712
        %v714 = vlog2.pop %v711
        %v715 = vmul.f32 %v714, 0.6931472
        %v716 = vlog2.pop %v713
        %v717 = vmul.f32 %v716, 0.6931472
        %v718 = vsub.f32 %v704, %v715
        %v719 = vsub.f32 %v705, %v717
        %720 = vst [vmem:[%s347] sm:$0xff] %v718
        %721 = vst [vmem:[%s347 + $0x8] sm:$0xff] %v719
        %s722 = smul.u32 2, %s21
        %p723 = scmp.lt.s32.totalorder %s722, 3
        %s724 = scalar_select %p723, %s722, 3
        %s725 = smul.addr %s724, 8
        %s726 = scalar_lea.vmem %s7, %s725
        // Predicated region
        $region69: #{domain_discriminator_forward.1} parent=47 // pred_check
          %p727 = pneg %p191
        $region70: #{domain_discriminator_forward.1} parent=47 // pred_check_branch
          %729 = sbr.rel (%p727) target = $region72
        $region71: #{domain_discriminator_forward.1} parent=47 // pred_region
          %s730 = smul.u32 2, %s21
        $region72: #{domain_discriminator_forward.1} parent=47 // pred_fallthru
          _
      $region48: #{domain_discriminator_forward.1} parent=5 // pred_fallthru
        _
      %p731 = scmp.le.s32.totalorder 2, %s16
      // Predicated region
      $region73: #{domain_discriminator_forward.1} parent=5 // pred_check
        %p732 = pneg %p731
      $region74: #{domain_discriminator_forward.1} parent=5 // pred_check_branch
        %734 = sbr.rel (%p732) target = $region76
      $region75: #{domain_discriminator_forward.1} parent=5 // pred_region
        %s735 = ssub.s32 %s16, 2
        // Predicated region
        $region77: #{domain_discriminator_forward.1} parent=75 // pred_check
          %p736 = pneg %p197
        $region78: #{domain_discriminator_forward.1} parent=75 // pred_check_branch
          %738 = sbr.rel (%p736) target = $region80
        $region79: #{domain_discriminator_forward.1} parent=75 // pred_region
          %s739 = smul.u32 2, %s22
          %p740 = scmp.lt.s32.totalorder %s739, 3
          %s741 = scalar_select %p740, %s739, 3
          %s742 = smul.addr %s741, 8
          %s743 = scalar_lea.vmem %s7, %s742
        $region80: #{domain_discriminator_forward.1} parent=75 // pred_fallthru
          _
      $region76: #{domain_discriminator_forward.1} parent=5 // pred_fallthru
        _
    $region6: #{domain_discriminator_forward.1} parent=1 // loop_footer
      %s20 = sadd.s32 1, %s16
    $region7: #{domain_discriminator_forward.1} parent=1 // loop_footer_branch
      %15 = sbr.rel target = $region3
    $region8: #{domain_discriminator_forward.1} parent=1 // loop_exit
      _
    %744 = vsyncpa [#allocation3], 1
    %s745 = scalar_lea.sflag [#allocation3], 1
    %746 = vsyncpa %s745, 1
    %747 = vsyncpa [#allocation5], 1
    %748 = vsyncpa [#allocation8], 1

</llo_original>
